<compile_context>
chip_gen: v7x
topology: tpu7x:2x2x1
jax: 0.10.0
libtpu: 0.0.40
codegen_flags: <defaults>
</compile_context>

<pallas_src>
import jax
import jax.numpy as jnp
from jax.experimental import pallas as pl
from jax.experimental.pallas import tpu as pltpu

Z_DIM = 32
POSE_DIM = 62
HID = 256
IN_PAD = 128                    # 32 + 62 = 94  -> padded to one full lane group
OUT_PAD = 128                   # 62            -> padded to one full lane group
ZPROJ = 2 * HID + OUT_PAD       # fused z-projection width for layers 2, 3, 4
WBIG = HID + ZPROJ              # 896: layer-1 weight + z-projections, fused
ROW_ALIGN = 16                  # bf16 sublane tile is (16, 128)


def _elu(x):
    # ELU(alpha=1), matching F.elu. Clamp so the unselected branch is finite.
    return jnp.where(x > 0, x, jnp.exp(jnp.minimum(x, 0.0)) - 1.0)


def _round_up(n, m):
    return ((n + m - 1) // m) * m


def expert_kernel(x_ref, wbig_ref, b1_ref, w2h_ref, b2_ref,
                  w3h_ref, b3_ref, w4h_ref, b4_ref, o_ref):
    wdt = wbig_ref.dtype                                      # bf16 weight dtype
    x = x_ref[...]                                            # (TB, 128) bf16 [z|p|0]

    # One fused matmul against the resident (128, 896) weight:
    #   cols   0:256  -> input_layer(cat(z, prev_pose)) pre-activation
    #   cols 256:512  -> z-projection for layer_1
    #   cols 512:768  -> z-projection for layer_2
    #   cols 768:896  -> z-projection for layer_3 (62 valid lanes)
    t = jnp.dot(x, wbig_ref[...], preferred_element_type=jnp.float32)  # (TB, 896)

    h = _elu(t[:, 0:HID] + b1_ref[...])                       # (TB, 256) f32

    # layer_1(cat(z, h))
    h = _elu(jnp.dot(h.astype(wdt), w2h_ref[...], preferred_element_type=jnp.float32)
             + t[:, HID:2 * HID] + b2_ref[...])

    # layer_2(cat(z, h))
    h = _elu(jnp.dot(h.astype(wdt), w3h_ref[...], preferred_element_type=jnp.float32)
             + t[:, 2 * HID:3 * HID] + b3_ref[...])

    # layer_3(cat(z, h)) -- no activation
    out = (jnp.dot(h.astype(wdt), w4h_ref[...], preferred_element_type=jnp.float32)
           + t[:, 3 * HID:] + b4_ref[...])
    o_ref[...] = out.astype(o_ref.dtype)                      # (TB, 128)


def prepare_expert_params(params, weight_dtype=jnp.bfloat16):
    """One-time weight preprocessing (hoisted out of the hot path).

    params: dict of PyTorch-layout (out_features, in_features) weights + biases.
    Returns lane-padded, pre-transposed, weight_dtype tensors for the kernel.
    """
    W1, b1 = params["input_layer"]   # (256, 94),  (256,)
    W2, b2 = params["layer_1"]       # (256, 288), (256,)
    W3, b3 = params["layer_2"]       # (256, 288), (256,)
    W4, b4 = params["layer_3"]       # (62, 288),  (62,)
    f32 = jnp.float32

    # Fused (128, 896) weight: [ layer-1 | z-proj L2 | z-proj L3 | z-proj L4 ].
    # Rows >= Z_DIM of the z-projection columns MUST stay exactly zero.
    wbig = jnp.zeros((IN_PAD, WBIG), f32)
    wbig = wbig.at[:Z_DIM + POSE_DIM, 0:HID].set(W1.T.astype(f32))
    wbig = wbig.at[:Z_DIM, HID:2 * HID].set(W2[:, :Z_DIM].T.astype(f32))
    wbig = wbig.at[:Z_DIM, 2 * HID:3 * HID].set(W3[:, :Z_DIM].T.astype(f32))
    wbig = wbig.at[:Z_DIM, 3 * HID:3 * HID + POSE_DIM].set(W4[:, :Z_DIM].T.astype(f32))

    # Hidden-state weights (pre-transposed to (in, out); w4h lane-padded).
    w2h = W2[:, Z_DIM:].T.astype(f32)                                  # (256, 256)
    w3h = W3[:, Z_DIM:].T.astype(f32)                                  # (256, 256)
    w4h = jnp.zeros((HID, OUT_PAD), f32).at[:, :POSE_DIM].set(W4[:, Z_DIM:].T.astype(f32))

    # Biases stay f32 (added after the f32 accumulation); b4 lane-padded.
    b4p = jnp.zeros((1, OUT_PAD), f32).at[:, :POSE_DIM].set(b4.astype(f32))

    return {
        "wbig": wbig.astype(weight_dtype),
        "w2h": w2h.astype(weight_dtype),
        "w3h": w3h.astype(weight_dtype),
        "w4h": w4h.astype(weight_dtype),
        "b1": b1.reshape(1, HID).astype(f32),
        "b2": b2.reshape(1, HID).astype(f32),
        "b3": b3.reshape(1, HID).astype(f32),
        "b4": b4p,
    }


def _pick_tile(B, row_tile):
    """Row tile: multiple of 16 (bf16 sublanes), capped at row_tile, and sized
    so the grid has >= 2 steps when B allows it (v7x 2-TC sharding)."""
    tb = _round_up(-(-B // 2), ROW_ALIGN)          # ~half the batch, aligned
    tb = min(tb, row_tile)
    tb = min(tb, _round_up(B, ROW_ALIGN))          # never exceed padded batch
    return max(tb, ROW_ALIGN)


def expert_forward(z, prev_pose, prep, *, row_tile=512, return_padded=False):
    """z: (32,) or (B, 32); prev_pose: (62,) or (B, 62); prep from
    prepare_expert_params.  Returns (B, 62) f32 (or the padded lane-dense
    (B, 128) slab if return_padded=True)."""
    single = z.ndim == 1
    if single:
        z = z[None, :]
        prev_pose = prev_pose[None, :]
    B = z.shape[0]

    # Pack [z | prev_pose | 0] into one lane-dense bf16 (B, 128) input with a
    # single fused concatenate (no extra HBM read/write passes).
    bf16 = jnp.bfloat16
    x = jnp.concatenate(
        [z.astype(bf16), prev_pose.astype(bf16),
         jnp.zeros((B, IN_PAD - Z_DIM - POSE_DIM), bf16)], axis=1)

    tb = _pick_tile(B, row_tile)
    bp = _round_up(B, tb)
    if bp != B:
        x = jnp.pad(x, ((0, bp - B), (0, 0)))
    grid = (bp // tb,)

    const = lambda shape: pl.BlockSpec(shape, lambda i: (0, 0))   # resident block
    in_specs = [
        pl.BlockSpec((tb, IN_PAD), lambda i: (i, 0)),   # x: streamed per tile (bf16)
        const((IN_PAD, WBIG)),                          # fused [w_in | z-projections]
        const((1, HID)),                                # b1
        const((HID, HID)), const((1, HID)),             # w2h, b2
        const((HID, HID)), const((1, HID)),             # w3h, b3
        const((HID, OUT_PAD)), const((1, OUT_PAD)),     # w4h, b4
    ]

    out = pl.pallas_call(
        expert_kernel,
        out_shape=jax.ShapeDtypeStruct((bp, OUT_PAD), jnp.float32),
        grid_spec=pltpu.PrefetchScalarGridSpec(
            num_scalar_prefetch=0,
            grid=grid,
            in_specs=in_specs,
            out_specs=pl.BlockSpec((tb, OUT_PAD), lambda i: (i, 0)),
        ),
        compiler_params=pltpu.CompilerParams(
            dimension_semantics=("parallel",),
            vmem_limit_bytes=32 << 20),      # above v5e's 16 MiB scoped default
    )(x, prep["wbig"], prep["b1"], prep["w2h"], prep["b2"],
      prep["w3h"], prep["b3"], prep["w4h"], prep["b4"])

    if return_padded:
        return out[0] if single else out
    out = out[:B, :POSE_DIM]
    return out[0] if single else out


def _init_linear(key, out_f, in_f):
    # Deterministic synthetic init (~ PyTorch uniform(-1/sqrt(in), 1/sqrt(in))).
    kw, kb = jax.random.split(key)
    bound = 1.0 / jnp.sqrt(in_f)
    W = jax.random.uniform(kw, (out_f, in_f), jnp.float32, -bound, bound)
    b = jax.random.uniform(kb, (out_f,), jnp.float32, -bound, bound)
    return W, b


def _reference_forward(z, prev_pose, params, weight_dtype=jnp.bfloat16):
    """Pure-JAX mirror of the PyTorch forward, applying the same bf16 rounding
    of weights / matmul inputs as the kernel (f32 accumulation)."""
    q = lambda a: a.astype(weight_dtype).astype(jnp.float32)

    def lin(Wb, x):
        W, b = Wb
        return q(x) @ q(W).T + b.astype(jnp.float32)

    def single(zz, pp):
        x = jnp.concatenate((zz, pp), 0)
        h = jnp.concatenate((zz, _elu(lin(params["input_layer"], x))), 0)
        h = jnp.concatenate((zz, _elu(lin(params["layer_1"], h))), 0)
        h = jnp.concatenate((zz, _elu(lin(params["layer_2"], h))), 0)
        return lin(params["layer_3"], h)

    if z.ndim == 1:
        return single(z, prev_pose)
    return jax.vmap(single)(z, prev_pose)


if __name__ == "__main__":
    key = jax.random.PRNGKey(0)
    k_z, k_p, k1, k2, k3, k4 = jax.random.split(key, 6)

    params = {
        "input_layer": _init_linear(k1, HID, Z_DIM + POSE_DIM),   # (256, 94)
        "layer_1":     _init_linear(k2, HID, Z_DIM + HID),        # (256, 288)
        "layer_2":     _init_linear(k3, HID, Z_DIM + HID),        # (256, 288)
        "layer_3":     _init_linear(k4, POSE_DIM, Z_DIM + HID),   # (62, 288)
    }

    # One-time parameter preparation (hoisted out of the hot path).
    prep = prepare_expert_params(params)
    fwd = jax.jit(expert_forward)

    # Small demo batch.
    B = 8
    z = jax.random.normal(k_z, (B, Z_DIM), jnp.float32)
    prev_pose = jax.random.normal(k_p, (B, POSE_DIM), jnp.float32)
    out = jax.block_until_ready(fwd(z, prev_pose, prep))
    assert out.shape == (B, POSE_DIM)
    ref = _reference_forward(z, prev_pose, params)
    assert jnp.allclose(out, ref, atol=2e-3, rtol=2e-3), (
        f"batched mismatch vs reference: max abs err {jnp.max(jnp.abs(out - ref))}")

    # Larger batch exercising multi-step grid + row padding (tb=32, 2 steps).
    B2 = 40
    z2 = jax.random.normal(jax.random.PRNGKey(1), (B2, Z_DIM), jnp.float32)
    p2 = jax.random.normal(jax.random.PRNGKey(2), (B2, POSE_DIM), jnp.float32)
    out2 = jax.block_until_ready(fwd(z2, p2, prep))
    ref2 = _reference_forward(z2, p2, params)
    assert out2.shape == (B2, POSE_DIM)
    assert jnp.allclose(out2, ref2, atol=2e-3, rtol=2e-3), (
        f"multi-tile mismatch: max abs err {jnp.max(jnp.abs(out2 - ref2))}")

    # Single-sample path (the exact signature of the PyTorch module).
    out1 = jax.block_until_ready(expert_forward(z[0], prev_pose[0], prep))
    ref1 = _reference_forward(z[0], prev_pose[0], params)
    assert out1.shape == (POSE_DIM,)
    assert jnp.allclose(out1, ref1, atol=2e-3, rtol=2e-3), "single-sample mismatch"

    print("KERNEL_OK")
</pallas_src>

<mosaic_0001>
module attributes {stable_mosaic.version = 11 : i64} {
  func.func @expert_kernel(%arg0: i32, %arg1: memref<16x128xbf16, #tpu.memory_space<vmem>>, %arg2: memref<128x896xbf16, #tpu.memory_space<vmem>>, %arg3: memref<1x256xf32, #tpu.memory_space<vmem>>, %arg4: memref<256x256xbf16, #tpu.memory_space<vmem>>, %arg5: memref<1x256xf32, #tpu.memory_space<vmem>>, %arg6: memref<256x256xbf16, #tpu.memory_space<vmem>>, %arg7: memref<1x256xf32, #tpu.memory_space<vmem>>, %arg8: memref<256x128xbf16, #tpu.memory_space<vmem>>, %arg9: memref<1x128xf32, #tpu.memory_space<vmem>>, %arg10: memref<16x128xf32, #tpu.memory_space<vmem>>) attributes {dimension_semantics = [#tpu.dimension_semantics<parallel>], iteration_bounds = array<i64: 1>, scalar_prefetch = 0 : i64, scratch_operands = 0 : i64, tpu.core_type = #tpu.core_type<tc>, window_params = [{transform_indices = @transform_0, window_bounds = array<i64: 16, 128>}, {pipeline_mode = #tpu.pipeline_mode<synchronous>, transform_indices = @transform_1, window_bounds = array<i64: 128, 896>}, {pipeline_mode = #tpu.pipeline_mode<synchronous>, transform_indices = @transform_2, window_bounds = array<i64: 1, 256>}, {pipeline_mode = #tpu.pipeline_mode<synchronous>, transform_indices = @transform_3, window_bounds = array<i64: 256, 256>}, {pipeline_mode = #tpu.pipeline_mode<synchronous>, transform_indices = @transform_4, window_bounds = array<i64: 1, 256>}, {pipeline_mode = #tpu.pipeline_mode<synchronous>, transform_indices = @transform_5, window_bounds = array<i64: 256, 256>}, {pipeline_mode = #tpu.pipeline_mode<synchronous>, transform_indices = @transform_6, window_bounds = array<i64: 1, 256>}, {pipeline_mode = #tpu.pipeline_mode<synchronous>, transform_indices = @transform_7, window_bounds = array<i64: 256, 128>}, {pipeline_mode = #tpu.pipeline_mode<synchronous>, transform_indices = @transform_8, window_bounds = array<i64: 1, 128>}, {transform_indices = @transform_9, window_bounds = array<i64: 16, 128>}]} {
    %c0 = arith.constant 0 : index
    %c0_0 = arith.constant 0 : index
    %0 = vector.load %arg1[%c0, %c0_0] : memref<16x128xbf16, #tpu.memory_space<vmem>>, vector<16x128xbf16>
    %c0_1 = arith.constant 0 : index
    %c0_2 = arith.constant 0 : index
    %1 = vector.load %arg2[%c0_1, %c0_2] : memref<128x896xbf16, #tpu.memory_space<vmem>>, vector<128x896xbf16>
    %cst = arith.constant dense<0.000000e+00> : vector<16x896xf32>
    %2 = tpu.matmul %0, %1, %cst {dimension_numbers = #tpu.dot_dimension_numbers<[1], [0], [0], [1], [0, 0, 1, 1], [], []>} : vector<16x128xbf16>, vector<128x896xbf16>, vector<16x896xf32> -> vector<16x896xf32>
    %3 = vector.extract_strided_slice %2 {offsets = [0, 0], sizes = [16, 256], strides = [1, 1]} : vector<16x896xf32> to vector<16x256xf32>
    %c0_3 = arith.constant 0 : index
    %c0_4 = arith.constant 0 : index
    %4 = vector.load %arg3[%c0_3, %c0_4] : memref<1x256xf32, #tpu.memory_space<vmem>>, vector<1x256xf32>
    %5 = vector.broadcast %4 : vector<1x256xf32> to vector<16x256xf32>
    %6 = arith.addf %3, %5 : vector<16x256xf32>
    %cst_5 = arith.constant 0.000000e+00 : f32
    %7 = vector.broadcast %cst_5 : f32 to vector<16x256xf32>
    %8 = arith.cmpf ogt, %6, %7 : vector<16x256xf32>
    %cst_6 = arith.constant 0.000000e+00 : f32
    %9 = vector.broadcast %cst_6 : f32 to vector<16x256xf32>
    %10 = arith.minimumf %6, %9 : vector<16x256xf32>
    %11 = math.exp %10 : vector<16x256xf32>
    %cst_7 = arith.constant 1.000000e+00 : f32
    %12 = vector.broadcast %cst_7 : f32 to vector<16x256xf32>
    %13 = arith.subf %11, %12 : vector<16x256xf32>
    %14 = arith.select %8, %6, %13 : vector<16x256xi1>, vector<16x256xf32>
    %15 = arith.truncf %14 : vector<16x256xf32> to vector<16x256xbf16>
    %c0_8 = arith.constant 0 : index
    %c0_9 = arith.constant 0 : index
    %16 = vector.load %arg4[%c0_8, %c0_9] : memref<256x256xbf16, #tpu.memory_space<vmem>>, vector<256x256xbf16>
    %cst_10 = arith.constant dense<0.000000e+00> : vector<16x256xf32>
    %17 = tpu.matmul %15, %16, %cst_10 {dimension_numbers = #tpu.dot_dimension_numbers<[1], [0], [0], [1], [0, 0, 1, 1], [], []>} : vector<16x256xbf16>, vector<256x256xbf16>, vector<16x256xf32> -> vector<16x256xf32>
    %18 = vector.extract_strided_slice %2 {offsets = [0, 256], sizes = [16, 256], strides = [1, 1]} : vector<16x896xf32> to vector<16x256xf32>
    %19 = arith.addf %17, %18 : vector<16x256xf32>
    %c0_11 = arith.constant 0 : index
    %c0_12 = arith.constant 0 : index
    %20 = vector.load %arg5[%c0_11, %c0_12] : memref<1x256xf32, #tpu.memory_space<vmem>>, vector<1x256xf32>
    %21 = vector.broadcast %20 : vector<1x256xf32> to vector<16x256xf32>
    %22 = arith.addf %19, %21 : vector<16x256xf32>
    %cst_13 = arith.constant 0.000000e+00 : f32
    %23 = vector.broadcast %cst_13 : f32 to vector<16x256xf32>
    %24 = arith.cmpf ogt, %22, %23 : vector<16x256xf32>
    %cst_14 = arith.constant 0.000000e+00 : f32
    %25 = vector.broadcast %cst_14 : f32 to vector<16x256xf32>
    %26 = arith.minimumf %22, %25 : vector<16x256xf32>
    %27 = math.exp %26 : vector<16x256xf32>
    %cst_15 = arith.constant 1.000000e+00 : f32
    %28 = vector.broadcast %cst_15 : f32 to vector<16x256xf32>
    %29 = arith.subf %27, %28 : vector<16x256xf32>
    %30 = arith.select %24, %22, %29 : vector<16x256xi1>, vector<16x256xf32>
    %31 = arith.truncf %30 : vector<16x256xf32> to vector<16x256xbf16>
    %c0_16 = arith.constant 0 : index
    %c0_17 = arith.constant 0 : index
    %32 = vector.load %arg6[%c0_16, %c0_17] : memref<256x256xbf16, #tpu.memory_space<vmem>>, vector<256x256xbf16>
    %cst_18 = arith.constant dense<0.000000e+00> : vector<16x256xf32>
    %33 = tpu.matmul %31, %32, %cst_18 {dimension_numbers = #tpu.dot_dimension_numbers<[1], [0], [0], [1], [0, 0, 1, 1], [], []>} : vector<16x256xbf16>, vector<256x256xbf16>, vector<16x256xf32> -> vector<16x256xf32>
    %34 = vector.extract_strided_slice %2 {offsets = [0, 512], sizes = [16, 256], strides = [1, 1]} : vector<16x896xf32> to vector<16x256xf32>
    %35 = arith.addf %33, %34 : vector<16x256xf32>
    %c0_19 = arith.constant 0 : index
    %c0_20 = arith.constant 0 : index
    %36 = vector.load %arg7[%c0_19, %c0_20] : memref<1x256xf32, #tpu.memory_space<vmem>>, vector<1x256xf32>
    %37 = vector.broadcast %36 : vector<1x256xf32> to vector<16x256xf32>
    %38 = arith.addf %35, %37 : vector<16x256xf32>
    %cst_21 = arith.constant 0.000000e+00 : f32
    %39 = vector.broadcast %cst_21 : f32 to vector<16x256xf32>
    %40 = arith.cmpf ogt, %38, %39 : vector<16x256xf32>
    %cst_22 = arith.constant 0.000000e+00 : f32
    %41 = vector.broadcast %cst_22 : f32 to vector<16x256xf32>
    %42 = arith.minimumf %38, %41 : vector<16x256xf32>
    %43 = math.exp %42 : vector<16x256xf32>
    %cst_23 = arith.constant 1.000000e+00 : f32
    %44 = vector.broadcast %cst_23 : f32 to vector<16x256xf32>
    %45 = arith.subf %43, %44 : vector<16x256xf32>
    %46 = arith.select %40, %38, %45 : vector<16x256xi1>, vector<16x256xf32>
    %47 = arith.truncf %46 : vector<16x256xf32> to vector<16x256xbf16>
    %c0_24 = arith.constant 0 : index
    %c0_25 = arith.constant 0 : index
    %48 = vector.load %arg8[%c0_24, %c0_25] : memref<256x128xbf16, #tpu.memory_space<vmem>>, vector<256x128xbf16>
    %cst_26 = arith.constant dense<0.000000e+00> : vector<16x128xf32>
    %49 = tpu.matmul %47, %48, %cst_26 {dimension_numbers = #tpu.dot_dimension_numbers<[1], [0], [0], [1], [0, 0, 1, 1], [], []>} : vector<16x256xbf16>, vector<256x128xbf16>, vector<16x128xf32> -> vector<16x128xf32>
    %50 = vector.extract_strided_slice %2 {offsets = [0, 768], sizes = [16, 128], strides = [1, 1]} : vector<16x896xf32> to vector<16x128xf32>
    %51 = arith.addf %49, %50 : vector<16x128xf32>
    %c0_27 = arith.constant 0 : index
    %c0_28 = arith.constant 0 : index
    %52 = vector.load %arg9[%c0_27, %c0_28] : memref<1x128xf32, #tpu.memory_space<vmem>>, vector<1x128xf32>
    %53 = vector.broadcast %52 : vector<1x128xf32> to vector<16x128xf32>
    %54 = arith.addf %51, %53 : vector<16x128xf32>
    %c0_29 = arith.constant 0 : index
    %c0_30 = arith.constant 0 : index
    %55 = vector.load %arg10[%c0_29, %c0_30] : memref<16x128xf32, #tpu.memory_space<vmem>>, vector<16x128xf32>
    tpu.vector_store %arg10[%c0_29, %c0_30], %54 {strides = array<i32>} : memref<16x128xf32, #tpu.memory_space<vmem>>, vector<16x128xf32>,
    return
  }
  func.func @transform_0(%arg0: i32) -> (i32, i32) {
    %c0_i32 = arith.constant 0 : i32
    %c0_i32_0 = arith.constant 0 : i32
    return %arg0, %c0_i32 : i32, i32
  }
  func.func @transform_1(%arg0: i32) -> (i32, i32) {
    %c0_i32 = arith.constant 0 : i32
    %c0_i32_0 = arith.constant 0 : i32
    %c0_i32_1 = arith.constant 0 : i32
    return %c0_i32, %c0_i32_0 : i32, i32
  }
  func.func @transform_2(%arg0: i32) -> (i32, i32) {
    %c0_i32 = arith.constant 0 : i32
    %c0_i32_0 = arith.constant 0 : i32
    %c0_i32_1 = arith.constant 0 : i32
    return %c0_i32, %c0_i32_0 : i32, i32
  }
  func.func @transform_3(%arg0: i32) -> (i32, i32) {
    %c0_i32 = arith.constant 0 : i32
    %c0_i32_0 = arith.constant 0 : i32
    %c0_i32_1 = arith.constant 0 : i32
    return %c0_i32, %c0_i32_0 : i32, i32
  }
  func.func @transform_4(%arg0: i32) -> (i32, i32) {
    %c0_i32 = arith.constant 0 : i32
    %c0_i32_0 = arith.constant 0 : i32
    %c0_i32_1 = arith.constant 0 : i32
    return %c0_i32, %c0_i32_0 : i32, i32
  }
  func.func @transform_5(%arg0: i32) -> (i32, i32) {
    %c0_i32 = arith.constant 0 : i32
    %c0_i32_0 = arith.constant 0 : i32
    %c0_i32_1 = arith.constant 0 : i32
    return %c0_i32, %c0_i32_0 : i32, i32
  }
  func.func @transform_6(%arg0: i32) -> (i32, i32) {
    %c0_i32 = arith.constant 0 : i32
    %c0_i32_0 = arith.constant 0 : i32
    %c0_i32_1 = arith.constant 0 : i32
    return %c0_i32, %c0_i32_0 : i32, i32
  }
  func.func @transform_7(%arg0: i32) -> (i32, i32) {
    %c0_i32 = arith.constant 0 : i32
    %c0_i32_0 = arith.constant 0 : i32
    %c0_i32_1 = arith.constant 0 : i32
    return %c0_i32, %c0_i32_0 : i32, i32
  }
  func.func @transform_8(%arg0: i32) -> (i32, i32) {
    %c0_i32 = arith.constant 0 : i32
    %c0_i32_0 = arith.constant 0 : i32
    %c0_i32_1 = arith.constant 0 : i32
    return %c0_i32, %c0_i32_0 : i32, i32
  }
  func.func @transform_9(%arg0: i32) -> (i32, i32) {
    %c0_i32 = arith.constant 0 : i32
    %c0_i32_0 = arith.constant 0 : i32
    return %arg0, %c0_i32 : i32, i32
  }
}

</mosaic_0001>

<llo_original>
// kernel: expert_forward.1
$region0: #{expert_forward.1}
  #allocation0 [shape = 'u32[]', space=smem, size = 0x4, offset = 0x4, fixed_abs, tag = 'smem constant byte address 0x4 - core index']
  #allocation1 [shape = 'u32[144,128]{1,0:T(1,128)}', space=vmem, size = 0x12000, scoped, tag = 'internal scratch']
  %s0 = inlined_call_operand.vmem [shape: bf16[16,128], index: 0, kind: input, shape index: {}]
  %s1 = inlined_call_operand.hbm [shape: bf16[128,896], index: 1, kind: input, shape index: {}]
  %s2 = inlined_call_operand.vmem [shape: f32[1,256], index: 2, kind: input, shape index: {}]
  %s3 = inlined_call_operand.hbm [shape: bf16[256,256], index: 3, kind: input, shape index: {}]
  %s4 = inlined_call_operand.vmem [shape: f32[1,256], index: 4, kind: input, shape index: {}]
  %s5 = inlined_call_operand.hbm [shape: bf16[256,256], index: 5, kind: input, shape index: {}]
  %s6 = inlined_call_operand.vmem [shape: f32[1,256], index: 6, kind: input, shape index: {}]
  %s7 = inlined_call_operand.hbm [shape: bf16[256,128], index: 7, kind: input, shape index: {}]
  %s8 = inlined_call_operand.vmem [shape: f32[1,128], index: 8, kind: input, shape index: {}]
  %s9 = inlined_call_operand.vmem [shape: f32[16,128], index: 9, kind: output, shape index: {}]
  %s10 = sld [smem:[#allocation0]]
  $region62: #{expert_forward.1} parent=0
    _
  %s12 = ssub.s32 1, %s10
  %s13 = scalar_select 0, %s12, %s10
  $region1: #{expert_forward.1} parent=0
    #allocation2 [shape = 'u8[229376]{0}', space=vmem, size = 0x38000, scoped, tag = 'input window, operand 1, single buffered']
    #allocation3 [shape = 's32[1]{0}', space=sflag, size = 0x4, scoped, tag = 'scoped memory for expert_forward.1']
    #allocation4 [shape = 'u8[131072]{0}', space=vmem, size = 0x20000, scoped, tag = 'input window, operand 3, single buffered']
    #allocation5 [shape = 's32[1]{0}', space=sflag, size = 0x4, scoped, tag = 'scoped memory for expert_forward.1']
    #allocation6 [shape = 'u8[131072]{0}', space=vmem, size = 0x20000, scoped, tag = 'input window, operand 5, single buffered']
    #allocation7 [shape = 'u8[65536]{0}', space=vmem, size = 0x10000, scoped, tag = 'input window, operand 7, single buffered']
    #allocation8 [shape = 's32[1]{0}', space=sflag, size = 0x4, scoped, tag = 'scoped memory for expert_forward.1']
    %14 = vsyncpa [#allocation3], 0
    %15 = vsyncpa [#allocation5], 0
    %16 = vsyncpa [#allocation8], 0
    // Predicated region
    $region2: #{expert_forward.1} parent=1 // pred_check
      _
    $region3: #{expert_forward.1} parent=1 // pred_check_branch
      %18 = sbr.rel (0) target = $region5
    $region4: #{expert_forward.1} parent=1 // pred_region
      _
    $region5: #{expert_forward.1} parent=1 // pred_fallthru
      _
    // Predicated region
    $region6: #{expert_forward.1} parent=1 // pred_check
      _
    $region7: #{expert_forward.1} parent=1 // pred_check_branch
      %20 = sbr.rel (0) target = $region9
    $region8: #{expert_forward.1} parent=1 // pred_region
      %s22 = ssub.s32 7168, 7168
      %23 = vsyncadd [#allocation3], %s22
      %s24 = sshll.u32 [#allocation2], 4
      %s25 = int_to_ptr.vmem [resolvable:$true] %s24
      %30 = dma.hbm_to_vmem [thread:$0]  %s1, 7168, %s25, [#allocation3], 448, 448, 28
    $region9: #{expert_forward.1} parent=1 // pred_fallthru
      _
    // Predicated region
    $region10: #{expert_forward.1} parent=1 // pred_check
      _
    $region11: #{expert_forward.1} parent=1 // pred_check_branch
      %32 = sbr.rel (0) target = $region13
    $region12: #{expert_forward.1} parent=1 // pred_region
      _
    $region13: #{expert_forward.1} parent=1 // pred_fallthru
      _
    // Predicated region
    $region14: #{expert_forward.1} parent=1 // pred_check
      _
    $region15: #{expert_forward.1} parent=1 // pred_check_branch
      %34 = sbr.rel (0) target = $region17
    $region16: #{expert_forward.1} parent=1 // pred_region
      %s36 = ssub.s32 4096, 4096
      %37 = vsyncadd [#allocation5], %s36
      %s38 = sshll.u32 [#allocation4], 4
      %s39 = int_to_ptr.vmem [resolvable:$true] %s38
      %44 = dma.hbm_to_vmem [thread:$0]  %s3, 4096, %s39, [#allocation5], 128, 128, 8
    $region17: #{expert_forward.1} parent=1 // pred_fallthru
      _
    // Predicated region
    $region18: #{expert_forward.1} parent=1 // pred_check
      _
    $region19: #{expert_forward.1} parent=1 // pred_check_branch
      %46 = sbr.rel (0) target = $region21
    $region20: #{expert_forward.1} parent=1 // pred_region
      _
    $region21: #{expert_forward.1} parent=1 // pred_fallthru
      _
    // Predicated region
    $region22: #{expert_forward.1} parent=1 // pred_check
      _
    $region23: #{expert_forward.1} parent=1 // pred_check_branch
      %48 = sbr.rel (0) target = $region25
    $region24: #{expert_forward.1} parent=1 // pred_region
      %s50 = ssub.s32 4096, 4096
      %51 = vsyncadd [#allocation5], %s50
      %s52 = sshll.u32 [#allocation6], 4
      %s53 = int_to_ptr.vmem [resolvable:$true] %s52
      %58 = dma.hbm_to_vmem [thread:$0]  %s5, 4096, %s53, [#allocation5], 128, 128, 8
    $region25: #{expert_forward.1} parent=1 // pred_fallthru
      _
    // Predicated region
    $region26: #{expert_forward.1} parent=1 // pred_check
      _
    $region27: #{expert_forward.1} parent=1 // pred_check_branch
      %60 = sbr.rel (0) target = $region29
    $region28: #{expert_forward.1} parent=1 // pred_region
      _
    $region29: #{expert_forward.1} parent=1 // pred_fallthru
      _
    // Predicated region
    $region30: #{expert_forward.1} parent=1 // pred_check
      _
    $region31: #{expert_forward.1} parent=1 // pred_check_branch
      %62 = sbr.rel (0) target = $region33
    $region32: #{expert_forward.1} parent=1 // pred_region
      %s64 = ssub.s32 2048, 2048
      %65 = vsyncadd [#allocation8], %s64
      %s66 = sshll.u32 [#allocation7], 4
      %s67 = int_to_ptr.vmem [resolvable:$true] %s66
      %72 = dma.hbm_to_vmem [thread:$0]  %s7, 2048, %s67, [#allocation8], 64, 64, 4
    $region33: #{expert_forward.1} parent=1 // pred_fallthru
      _
    // Predicated region
    $region34: #{expert_forward.1} parent=1 // pred_check
      _
    $region35: #{expert_forward.1} parent=1 // pred_check_branch
      %74 = sbr.rel (0) target = $region37
    $region36: #{expert_forward.1} parent=1 // pred_region
      _
    $region37: #{expert_forward.1} parent=1 // pred_fallthru
      _
    // Predicated region
    $region38: #{expert_forward.1} parent=1 // pred_check
      _
    $region39: #{expert_forward.1} parent=1 // pred_check_branch
      %76 = sbr.rel (0) target = $region41
    $region40: #{expert_forward.1} parent=1 // pred_region
      %77 = dma.done [#allocation3], 7168
    $region41: #{expert_forward.1} parent=1 // pred_fallthru
      _
    // Predicated region
    $region42: #{expert_forward.1} parent=1 // pred_check
      _
    $region43: #{expert_forward.1} parent=1 // pred_check_branch
      %79 = sbr.rel (0) target = $region45
    $region44: #{expert_forward.1} parent=1 // pred_region
      %80 = dma.done [#allocation5], 4096
    $region45: #{expert_forward.1} parent=1 // pred_fallthru
      _
    // Predicated region
    $region46: #{expert_forward.1} parent=1 // pred_check
      _
    $region47: #{expert_forward.1} parent=1 // pred_check_branch
      %82 = sbr.rel (0) target = $region49
    $region48: #{expert_forward.1} parent=1 // pred_region
      %83 = dma.done [#allocation5], 4096
    $region49: #{expert_forward.1} parent=1 // pred_fallthru
      _
    // Predicated region
    $region50: #{expert_forward.1} parent=1 // pred_check
      _
    $region51: #{expert_forward.1} parent=1 // pred_check_branch
      %85 = sbr.rel (0) target = $region53
    $region52: #{expert_forward.1} parent=1 // pred_region
      %86 = dma.done [#allocation8], 2048
    $region53: #{expert_forward.1} parent=1 // pred_fallthru
      _
    %v88 = vld [vmem:[%s0] sm:$0xf]
    %v89 = vld [vmem:[%s0 + $0x4] sm:$0xf]
    %v90 = vld [vmem:[#allocation2] sm:$0xff]
    %v91 = vld [vmem:[#allocation2 + $0x8] sm:$0xff]
    %v92 = vld [vmem:[#allocation2 + $0x10] sm:$0xff]
    %v93 = vld [vmem:[#allocation2 + $0x18] sm:$0xf]
    %v94 = vld [vmem:[#allocation2 + $0x1c] sm:$0xff]
    %v95 = vld [vmem:[#allocation2 + $0x24] sm:$0xff]
    %v96 = vld [vmem:[#allocation2 + $0x2c] sm:$0xff]
    %v97 = vld [vmem:[#allocation2 + $0x34] sm:$0xf]
    %v98 = vld [vmem:[#allocation2 + $0x38] sm:$0xff]
    %v99 = vld [vmem:[#allocation2 + $0x40] sm:$0xff]
    %v100 = vld [vmem:[#allocation2 + $0x48] sm:$0xff]
    %v101 = vld [vmem:[#allocation2 + $0x50] sm:$0xf]
    %v102 = vld [vmem:[#allocation2 + $0x54] sm:$0xff]
    %v103 = vld [vmem:[#allocation2 + $0x5c] sm:$0xff]
    %v104 = vld [vmem:[#allocation2 + $0x64] sm:$0xff]
    %v105 = vld [vmem:[#allocation2 + $0x6c] sm:$0xf]
    %v106 = vld [vmem:[#allocation2 + $0x70] sm:$0xff]
    %v107 = vld [vmem:[#allocation2 + $0x78] sm:$0xff]
    %v108 = vld [vmem:[#allocation2 + $0x80] sm:$0xff]
    %v109 = vld [vmem:[#allocation2 + $0x88] sm:$0xf]
    %v110 = vld [vmem:[#allocation2 + $0x8c] sm:$0xff]
    %v111 = vld [vmem:[#allocation2 + $0x94] sm:$0xff]
    %v112 = vld [vmem:[#allocation2 + $0x9c] sm:$0xff]
    %v113 = vld [vmem:[#allocation2 + $0xa4] sm:$0xf]
    %v114 = vld [vmem:[#allocation2 + $0xa8] sm:$0xff]
    %v115 = vld [vmem:[#allocation2 + $0xb0] sm:$0xff]
    %v116 = vld [vmem:[#allocation2 + $0xb8] sm:$0xff]
    %v117 = vld [vmem:[#allocation2 + $0xc0] sm:$0xf]
    %v118 = vld [vmem:[#allocation2 + $0xc4] sm:$0xff]
    %v119 = vld [vmem:[#allocation2 + $0xcc] sm:$0xff]
    %v120 = vld [vmem:[#allocation2 + $0xd4] sm:$0xff]
    %v121 = vld [vmem:[#allocation2 + $0xdc] sm:$0xf]
    %v122 = vld [vmem:[#allocation2 + $0xe0] sm:$0xff]
    %v123 = vld [vmem:[#allocation2 + $0xe8] sm:$0xff]
    %v124 = vld [vmem:[#allocation2 + $0xf0] sm:$0xff]
    %v125 = vld [vmem:[#allocation2 + $0xf8] sm:$0xf]
    %v126 = vld [vmem:[#allocation2 + $0xfc] sm:$0xff]
    %v127 = vld [vmem:[#allocation2 + $0x104] sm:$0xff]
    %v128 = vld [vmem:[#allocation2 + $0x10c] sm:$0xff]
    %v129 = vld [vmem:[#allocation2 + $0x114] sm:$0xf]
    %v130 = vld [vmem:[#allocation2 + $0x118] sm:$0xff]
    %v131 = vld [vmem:[#allocation2 + $0x120] sm:$0xff]
    %v132 = vld [vmem:[#allocation2 + $0x128] sm:$0xff]
    %v133 = vld [vmem:[#allocation2 + $0x130] sm:$0xf]
    %v134 = vld [vmem:[#allocation2 + $0x134] sm:$0xff]
    %v135 = vld [vmem:[#allocation2 + $0x13c] sm:$0xff]
    %v136 = vld [vmem:[#allocation2 + $0x144] sm:$0xff]
    %v137 = vld [vmem:[#allocation2 + $0x14c] sm:$0xf]
    %v138 = vld [vmem:[#allocation2 + $0x150] sm:$0xff]
    %v139 = vld [vmem:[#allocation2 + $0x158] sm:$0xff]
    %v140 = vld [vmem:[#allocation2 + $0x160] sm:$0xff]
    %v141 = vld [vmem:[#allocation2 + $0x168] sm:$0xf]
    %v142 = vld [vmem:[#allocation2 + $0x16c] sm:$0xff]
    %v143 = vld [vmem:[#allocation2 + $0x174] sm:$0xff]
    %v144 = vld [vmem:[#allocation2 + $0x17c] sm:$0xff]
    %v145 = vld [vmem:[#allocation2 + $0x184] sm:$0xf]
    %v146 = vld [vmem:[#allocation2 + $0x188] sm:$0xff]
    %v147 = vld [vmem:[#allocation2 + $0x190] sm:$0xff]
    %v148 = vld [vmem:[#allocation2 + $0x198] sm:$0xff]
    %v149 = vld [vmem:[#allocation2 + $0x1a0] sm:$0xf]
    %v150 = vld [vmem:[#allocation2 + $0x1a4] sm:$0xff]
    %v151 = vld [vmem:[#allocation2 + $0x1ac] sm:$0xff]
    %v152 = vld [vmem:[#allocation2 + $0x1b4] sm:$0xff]
    %v153 = vld [vmem:[#allocation2 + $0x1bc] sm:$0xf]
    %v156 = vunpack.c.l.b16 %v88
    %v157 = vunpack.c.l.b16 %v89
    %v158 = vpack.c.b16 %v157, %v156
    %v224 = vunpack.c.l.b16 %v90
    %v225 = vunpack.c.h.b16 %v90
    %v226 = vunpack.c.l.b16 %v91
    %v227 = vunpack.c.h.b16 %v91
    %v228 = vunpack.c.l.b16 %v92
    %v229 = vunpack.c.h.b16 %v92
    %v230 = vunpack.c.l.b16 %v93
    %v231 = vunpack.c.l.b16 %v94
    %v232 = vunpack.c.h.b16 %v94
    %v233 = vunpack.c.l.b16 %v95
    %v234 = vunpack.c.h.b16 %v95
    %v235 = vunpack.c.l.b16 %v96
    %v236 = vunpack.c.h.b16 %v96
    %v237 = vunpack.c.l.b16 %v97
    %v238 = vunpack.c.l.b16 %v98
    %v239 = vunpack.c.h.b16 %v98
    %v240 = vunpack.c.l.b16 %v99
    %v241 = vunpack.c.h.b16 %v99
    %v242 = vunpack.c.l.b16 %v100
    %v243 = vunpack.c.h.b16 %v100
    %v244 = vunpack.c.l.b16 %v101
    %v245 = vunpack.c.l.b16 %v102
    %v246 = vunpack.c.h.b16 %v102
    %v247 = vunpack.c.l.b16 %v103
    %v248 = vunpack.c.h.b16 %v103
    %v249 = vunpack.c.l.b16 %v104
    %v250 = vunpack.c.h.b16 %v104
    %v251 = vunpack.c.l.b16 %v105
    %v252 = vunpack.c.l.b16 %v106
    %v253 = vunpack.c.h.b16 %v106
    %v254 = vunpack.c.l.b16 %v107
    %v255 = vunpack.c.h.b16 %v107
    %v256 = vunpack.c.l.b16 %v108
    %v257 = vunpack.c.h.b16 %v108
    %v258 = vunpack.c.l.b16 %v109
    %v259 = vunpack.c.l.b16 %v110
    %v260 = vunpack.c.h.b16 %v110
    %v261 = vunpack.c.l.b16 %v111
    %v262 = vunpack.c.h.b16 %v111
    %v263 = vunpack.c.l.b16 %v112
    %v264 = vunpack.c.h.b16 %v112
    %v265 = vunpack.c.l.b16 %v113
    %v266 = vunpack.c.l.b16 %v114
    %v267 = vunpack.c.h.b16 %v114
    %v268 = vunpack.c.l.b16 %v115
    %v269 = vunpack.c.h.b16 %v115
    %v270 = vunpack.c.l.b16 %v116
    %v271 = vunpack.c.h.b16 %v116
    %v272 = vunpack.c.l.b16 %v117
    %v273 = vunpack.c.l.b16 %v118
    %v274 = vunpack.c.h.b16 %v118
    %v275 = vunpack.c.l.b16 %v119
    %v276 = vunpack.c.h.b16 %v119
    %v277 = vunpack.c.l.b16 %v120
    %v278 = vunpack.c.h.b16 %v120
    %v279 = vunpack.c.l.b16 %v121
    %v280 = vunpack.c.l.b16 %v122
    %v281 = vunpack.c.h.b16 %v122
    %v282 = vunpack.c.l.b16 %v123
    %v283 = vunpack.c.h.b16 %v123
    %v284 = vunpack.c.l.b16 %v124
    %v285 = vunpack.c.h.b16 %v124
    %v286 = vunpack.c.l.b16 %v125
    %v287 = vunpack.c.l.b16 %v126
    %v288 = vunpack.c.h.b16 %v126
    %v289 = vunpack.c.l.b16 %v127
    %v290 = vunpack.c.h.b16 %v127
    %v291 = vunpack.c.l.b16 %v128
    %v292 = vunpack.c.h.b16 %v128
    %v293 = vunpack.c.l.b16 %v129
    %v294 = vunpack.c.l.b16 %v130
    %v295 = vunpack.c.h.b16 %v130
    %v296 = vunpack.c.l.b16 %v131
    %v297 = vunpack.c.h.b16 %v131
    %v298 = vunpack.c.l.b16 %v132
    %v299 = vunpack.c.h.b16 %v132
    %v300 = vunpack.c.l.b16 %v133
    %v301 = vunpack.c.l.b16 %v134
    %v302 = vunpack.c.h.b16 %v134
    %v303 = vunpack.c.l.b16 %v135
    %v304 = vunpack.c.h.b16 %v135
    %v305 = vunpack.c.l.b16 %v136
    %v306 = vunpack.c.h.b16 %v136
    %v307 = vunpack.c.l.b16 %v137
    %v308 = vunpack.c.l.b16 %v138
    %v309 = vunpack.c.h.b16 %v138
    %v310 = vunpack.c.l.b16 %v139
    %v311 = vunpack.c.h.b16 %v139
    %v312 = vunpack.c.l.b16 %v140
    %v313 = vunpack.c.h.b16 %v140
    %v314 = vunpack.c.l.b16 %v141
    %v315 = vunpack.c.l.b16 %v142
    %v316 = vunpack.c.h.b16 %v142
    %v317 = vunpack.c.l.b16 %v143
    %v318 = vunpack.c.h.b16 %v143
    %v319 = vunpack.c.l.b16 %v144
    %v320 = vunpack.c.h.b16 %v144
    %v321 = vunpack.c.l.b16 %v145
    %v322 = vunpack.c.l.b16 %v146
    %v323 = vunpack.c.h.b16 %v146
    %v324 = vunpack.c.l.b16 %v147
    %v325 = vunpack.c.h.b16 %v147
    %v326 = vunpack.c.l.b16 %v148
    %v327 = vunpack.c.h.b16 %v148
    %v328 = vunpack.c.l.b16 %v149
    %v329 = vunpack.c.l.b16 %v150
    %v330 = vunpack.c.h.b16 %v150
    %v331 = vunpack.c.l.b16 %v151
    %v332 = vunpack.c.h.b16 %v151
    %v333 = vunpack.c.l.b16 %v152
    %v334 = vunpack.c.h.b16 %v152
    %v335 = vunpack.c.l.b16 %v153
    %v336 = vpack.c.b16 %v231, %v224
    %v337 = vpack.c.b16 %v232, %v225
    %v338 = vpack.c.b16 %v233, %v226
    %v339 = vpack.c.b16 %v234, %v227
    %v340 = vpack.c.b16 %v235, %v228
    %v341 = vpack.c.b16 %v236, %v229
    %v342 = vpack.c.b16 %v237, %v230
    %v343 = vpack.c.b16 %v245, %v238
    %v344 = vpack.c.b16 %v246, %v239
    %v345 = vpack.c.b16 %v247, %v240
    %v346 = vpack.c.b16 %v248, %v241
    %v347 = vpack.c.b16 %v249, %v242
    %v348 = vpack.c.b16 %v250, %v243
    %v349 = vpack.c.b16 %v251, %v244
    %v350 = vpack.c.b16 %v259, %v252
    %v351 = vpack.c.b16 %v260, %v253
    %v352 = vpack.c.b16 %v261, %v254
    %v353 = vpack.c.b16 %v262, %v255
    %v354 = vpack.c.b16 %v263, %v256
    %v355 = vpack.c.b16 %v264, %v257
    %v356 = vpack.c.b16 %v265, %v258
    %v357 = vpack.c.b16 %v273, %v266
    %v358 = vpack.c.b16 %v274, %v267
    %v359 = vpack.c.b16 %v275, %v268
    %v360 = vpack.c.b16 %v276, %v269
    %v361 = vpack.c.b16 %v277, %v270
    %v362 = vpack.c.b16 %v278, %v271
    %v363 = vpack.c.b16 %v279, %v272
    %v364 = vpack.c.b16 %v287, %v280
    %v365 = vpack.c.b16 %v288, %v281
    %v366 = vpack.c.b16 %v289, %v282
    %v367 = vpack.c.b16 %v290, %v283
    %v368 = vpack.c.b16 %v291, %v284
    %v369 = vpack.c.b16 %v292, %v285
    %v370 = vpack.c.b16 %v293, %v286
    %v371 = vpack.c.b16 %v301, %v294
    %v372 = vpack.c.b16 %v302, %v295
    %v373 = vpack.c.b16 %v303, %v296
    %v374 = vpack.c.b16 %v304, %v297
    %v375 = vpack.c.b16 %v305, %v298
    %v376 = vpack.c.b16 %v306, %v299
    %v377 = vpack.c.b16 %v307, %v300
    %v378 = vpack.c.b16 %v315, %v308
    %v379 = vpack.c.b16 %v316, %v309
    %v380 = vpack.c.b16 %v317, %v310
    %v381 = vpack.c.b16 %v318, %v311
    %v382 = vpack.c.b16 %v319, %v312
    %v383 = vpack.c.b16 %v320, %v313
    %v384 = vpack.c.b16 %v321, %v314
    %v385 = vpack.c.b16 %v329, %v322
    %v386 = vpack.c.b16 %v330, %v323
    %v387 = vpack.c.b16 %v331, %v324
    %v388 = vpack.c.b16 %v332, %v325
    %v389 = vpack.c.b16 %v333, %v326
    %v390 = vpack.c.b16 %v334, %v327
    %v391 = vpack.c.b16 %v335, %v328
    %448 = vmatprep.subr.bf16.mxu0 %v337
    %449 = vmatpush1.bf16.msra.mxu0 %v336
    %450 = vmatprep.subr.bf16.mxu0 %v344
    %451 = vmatpush1.bf16.msra.mxu0 %v343
    %452 = vmatprep.subr.bf16.mxu0 %v351
    %453 = vmatpush1.bf16.msra.mxu0 %v350
    %454 = vmatprep.subr.bf16.mxu0 %v358
    %455 = vmatpush1.bf16.msra.mxu0 %v357
    %456 = vmatprep.subr.bf16.mxu0 %v365
    %457 = vmatpush1.bf16.msra.mxu0 %v364
    %458 = vmatprep.subr.bf16.mxu0 %v372
    %459 = vmatpush1.bf16.msra.mxu0 %v371
    %460 = vmatprep.subr.bf16.mxu0 %v379
    %461 = vmatpush1.bf16.msra.mxu0 %v378
    %462 = vmatprep.subr.bf16.mxu0 %v386
    %463 = vmatpush1.bf16.msra.mxu0 %v385
    %464 = vmatprep.subr.bf16.mxu0 0
    %465 = vmatpush1.bf16.msra.mxu0 0
    %466 = vmatprep.subr.bf16.mxu0 0
    %467 = vmatpush1.bf16.msra.mxu0 0
    %468 = vmatprep.subr.bf16.mxu0 0
    %469 = vmatpush1.bf16.msra.mxu0 0
    %470 = vmatprep.subr.bf16.mxu0 0
    %471 = vmatpush1.bf16.msra.mxu0 0
    %472 = vmatprep.subr.bf16.mxu0 0
    %473 = vmatpush1.bf16.msra.mxu0 0
    %474 = vmatprep.subr.bf16.mxu0 0
    %475 = vmatpush1.bf16.msra.mxu0 0
    %476 = vmatprep.subr.bf16.mxu0 0
    %477 = vmatpush1.bf16.msra.mxu0 0
    %478 = vmatprep.subr.bf16.mxu0 0
    %479 = vmatpush1.bf16.msra.mxu0 0
    %480 = vmatprep.mubr.bf16.mxu0 0
    %481 = vmatmul.mubr.bf16.gmra.mrb[0].mxu0 %v158
    %v482 = vpop.f32.mrb[0].mxu0
    %v483 = vadd.f32 0.0, %v482
    %v484 = vpop.f32.mrb[0].mxu0
    %v485 = vadd.f32 0.0, %v484
    %v486 = vpop.f32.mrb[0].mxu0
    %v487 = vadd.f32 0.0, %v486
    %v488 = vpop.f32.mrb[0].mxu0
    %v489 = vadd.f32 0.0, %v488
    %490 = vdwg.mxu0
    %491 = vmatprep.subr.bf16.mxu0 %v339
    %492 = vmatpush1.bf16.msra.mxu0 %v338
    %493 = vmatprep.subr.bf16.mxu0 %v346
    %494 = vmatpush1.bf16.msra.mxu0 %v345
    %495 = vmatprep.subr.bf16.mxu0 %v353
    %496 = vmatpush1.bf16.msra.mxu0 %v352
    %497 = vmatprep.subr.bf16.mxu0 %v360
    %498 = vmatpush1.bf16.msra.mxu0 %v359
    %499 = vmatprep.subr.bf16.mxu0 %v367
    %500 = vmatpush1.bf16.msra.mxu0 %v366
    %501 = vmatprep.subr.bf16.mxu0 %v374
    %502 = vmatpush1.bf16.msra.mxu0 %v373
    %503 = vmatprep.subr.bf16.mxu0 %v381
    %504 = vmatpush1.bf16.msra.mxu0 %v380
    %505 = vmatprep.subr.bf16.mxu0 %v388
    %506 = vmatpush1.bf16.msra.mxu0 %v387
    %507 = vmatprep.subr.bf16.mxu0 0
    %508 = vmatpush1.bf16.msra.mxu0 0
    %509 = vmatprep.subr.bf16.mxu0 0
    %510 = vmatpush1.bf16.msra.mxu0 0
    %511 = vmatprep.subr.bf16.mxu0 0
    %512 = vmatpush1.bf16.msra.mxu0 0
    %513 = vmatprep.subr.bf16.mxu0 0
    %514 = vmatpush1.bf16.msra.mxu0 0
    %515 = vmatprep.subr.bf16.mxu0 0
    %516 = vmatpush1.bf16.msra.mxu0 0
    %517 = vmatprep.subr.bf16.mxu0 0
    %518 = vmatpush1.bf16.msra.mxu0 0
    %519 = vmatprep.subr.bf16.mxu0 0
    %520 = vmatpush1.bf16.msra.mxu0 0
    %521 = vmatprep.subr.bf16.mxu0 0
    %522 = vmatpush1.bf16.msra.mxu0 0
    %523 = vmatprep.mubr.bf16.mxu0 0
    %524 = vmatmul.mubr.bf16.gmra.mrb[0].mxu0 %v158
    %v525 = vpop.f32.mrb[0].mxu0
    %v526 = vadd.f32 0.0, %v525
    %v527 = vpop.f32.mrb[0].mxu0
    %v528 = vadd.f32 0.0, %v527
    %v529 = vpop.f32.mrb[0].mxu0
    %v530 = vadd.f32 0.0, %v529
    %v531 = vpop.f32.mrb[0].mxu0
    %v532 = vadd.f32 0.0, %v531
    %533 = vdwg.mxu0
    %534 = vmatprep.subr.bf16.mxu0 %v341
    %535 = vmatpush1.bf16.msra.mxu0 %v340
    %536 = vmatprep.subr.bf16.mxu0 %v348
    %537 = vmatpush1.bf16.msra.mxu0 %v347
    %538 = vmatprep.subr.bf16.mxu0 %v355
    %539 = vmatpush1.bf16.msra.mxu0 %v354
    %540 = vmatprep.subr.bf16.mxu0 %v362
    %541 = vmatpush1.bf16.msra.mxu0 %v361
    %542 = vmatprep.subr.bf16.mxu0 %v369
    %543 = vmatpush1.bf16.msra.mxu0 %v368
    %544 = vmatprep.subr.bf16.mxu0 %v376
    %545 = vmatpush1.bf16.msra.mxu0 %v375
    %546 = vmatprep.subr.bf16.mxu0 %v383
    %547 = vmatpush1.bf16.msra.mxu0 %v382
    %548 = vmatprep.subr.bf16.mxu0 %v390
    %549 = vmatpush1.bf16.msra.mxu0 %v389
    %550 = vmatprep.subr.bf16.mxu0 0
    %551 = vmatpush1.bf16.msra.mxu0 0
    %552 = vmatprep.subr.bf16.mxu0 0
    %553 = vmatpush1.bf16.msra.mxu0 0
    %554 = vmatprep.subr.bf16.mxu0 0
    %555 = vmatpush1.bf16.msra.mxu0 0
    %556 = vmatprep.subr.bf16.mxu0 0
    %557 = vmatpush1.bf16.msra.mxu0 0
    %558 = vmatprep.subr.bf16.mxu0 0
    %559 = vmatpush1.bf16.msra.mxu0 0
    %560 = vmatprep.subr.bf16.mxu0 0
    %561 = vmatpush1.bf16.msra.mxu0 0
    %562 = vmatprep.subr.bf16.mxu0 0
    %563 = vmatpush1.bf16.msra.mxu0 0
    %564 = vmatprep.subr.bf16.mxu0 0
    %565 = vmatpush1.bf16.msra.mxu0 0
    %566 = vmatprep.mubr.bf16.mxu0 0
    %567 = vmatmul.mubr.bf16.gmra.mrb[0].mxu0 %v158
    %v568 = vpop.f32.mrb[0].mxu0
    %v569 = vadd.f32 0.0, %v568
    %v570 = vpop.f32.mrb[0].mxu0
    %v571 = vadd.f32 0.0, %v570
    %v572 = vpop.f32.mrb[0].mxu0
    %v573 = vadd.f32 0.0, %v572
    %v574 = vpop.f32.mrb[0].mxu0
    %v575 = vadd.f32 0.0, %v574
    %576 = vdwg.mxu0
    %577 = vmatprep.subr.bf16.mxu0 0
    %578 = vmatpush1.bf16.msra.mxu0 %v342
    %579 = vmatprep.subr.bf16.mxu0 0
    %580 = vmatpush1.bf16.msra.mxu0 %v349
    %581 = vmatprep.subr.bf16.mxu0 0
    %582 = vmatpush1.bf16.msra.mxu0 %v356
    %583 = vmatprep.subr.bf16.mxu0 0
    %584 = vmatpush1.bf16.msra.mxu0 %v363
    %585 = vmatprep.subr.bf16.mxu0 0
    %586 = vmatpush1.bf16.msra.mxu0 %v370
    %587 = vmatprep.subr.bf16.mxu0 0
    %588 = vmatpush1.bf16.msra.mxu0 %v377
    %589 = vmatprep.subr.bf16.mxu0 0
    %590 = vmatpush1.bf16.msra.mxu0 %v384
    %591 = vmatprep.subr.bf16.mxu0 0
    %592 = vmatpush1.bf16.msra.mxu0 %v391
    %593 = vmatprep.subr.bf16.mxu0 0
    %594 = vmatpush1.bf16.msra.mxu0 0
    %595 = vmatprep.subr.bf16.mxu0 0
    %596 = vmatpush1.bf16.msra.mxu0 0
    %597 = vmatprep.subr.bf16.mxu0 0
    %598 = vmatpush1.bf16.msra.mxu0 0
    %599 = vmatprep.subr.bf16.mxu0 0
    %600 = vmatpush1.bf16.msra.mxu0 0
    %601 = vmatprep.subr.bf16.mxu0 0
    %602 = vmatpush1.bf16.msra.mxu0 0
    %603 = vmatprep.subr.bf16.mxu0 0
    %604 = vmatpush1.bf16.msra.mxu0 0
    %605 = vmatprep.subr.bf16.mxu0 0
    %606 = vmatpush1.bf16.msra.mxu0 0
    %607 = vmatprep.subr.bf16.mxu0 0
    %608 = vmatpush1.bf16.msra.mxu0 0
    %609 = vmatprep.mubr.bf16.mxu0 0
    %610 = vmatmul.mubr.bf16.gmra.mrb[0].mxu0 %v158
    %v611 = vpop.f32.mrb[0].mxu0
    %v612 = vadd.f32 0.0, %v611
    %v613 = vpop.f32.mrb[0].mxu0
    %v614 = vpop.f32.mrb[0].mxu0
    %v615 = vadd.f32 0.0, %v614
    %v616 = vpop.f32.mrb[0].mxu0
    %617 = vdwg.mxu0
    %v618 = vld [vmem:[%s2] sm:$0x3]
    %v620 = vlaneseq
    %v621 = vshrl.u32 %v620, 7
    %v622 = vsub.s32 0, %v621
    %v623 = vrot.slane %v618, %v622
    %v624 = vlaneseq
    %v625 = vshrl.u32 %v624, 7
    %v626 = vsub.s32 1, %v625
    %v627 = vrot.slane %v618, %v626
    %v630 = vadd.f32 %v483, %v623
    %v631 = vadd.f32 %v485, %v627
    %v632 = vadd.f32 %v487, %v623
    %v633 = vadd.f32 %v489, %v627
    %vm634 = vcmp.gt.f32.partialorder %v630, 0.0
    %vm635 = vcmp.gt.f32.partialorder %v631, 0.0
    %vm636 = vcmp.gt.f32.partialorder %v632, 0.0
    %vm637 = vcmp.gt.f32.partialorder %v633, 0.0
    %v638 = vmin.f32 %v630, 0.0
    %v639 = vmin.f32 %v631, 0.0
    %v640 = vmin.f32 %v632, 0.0
    %v641 = vmin.f32 %v633, 0.0
    %v642 = vmul.f32 %v638, 1.442695
    %v643 = vpow.pop %v642
    %v644 = vmul.f32 %v639, 1.442695
    %v645 = vpow.pop %v644
    %v646 = vmul.f32 %v640, 1.442695
    %v647 = vpow.pop %v646
    %v648 = vmul.f32 %v641, 1.442695
    %v649 = vpow.pop %v648
    %v650 = vsub.f32 %v643, 1.0
    %v651 = vsub.f32 %v645, 1.0
    %v652 = vsub.f32 %v647, 1.0
    %v653 = vsub.f32 %v649, 1.0
    %v654 = vsel %vm634, %v630, %v650
    %v655 = vsel %vm635, %v631, %v651
    %v656 = vsel %vm636, %v632, %v652
    %v657 = vsel %vm637, %v633, %v653
    %v658 = vpack.c.bf16 %v656, %v654
    %v659 = vpack.c.bf16 %v657, %v655
    %v660 = vld [vmem:[#allocation4] sm:$0xff]
    %v661 = vld [vmem:[#allocation4 + $0x8] sm:$0xff]
    %v662 = vld [vmem:[#allocation4 + $0x10] sm:$0xff]
    %v663 = vld [vmem:[#allocation4 + $0x18] sm:$0xff]
    %v664 = vld [vmem:[#allocation4 + $0x20] sm:$0xff]
    %v665 = vld [vmem:[#allocation4 + $0x28] sm:$0xff]
    %v666 = vld [vmem:[#allocation4 + $0x30] sm:$0xff]
    %v667 = vld [vmem:[#allocation4 + $0x38] sm:$0xff]
    %v668 = vld [vmem:[#allocation4 + $0x40] sm:$0xff]
    %v669 = vld [vmem:[#allocation4 + $0x48] sm:$0xff]
    %v670 = vld [vmem:[#allocation4 + $0x50] sm:$0xff]
    %v671 = vld [vmem:[#allocation4 + $0x58] sm:$0xff]
    %v672 = vld [vmem:[#allocation4 + $0x60] sm:$0xff]
    %v673 = vld [vmem:[#allocation4 + $0x68] sm:$0xff]
    %v674 = vld [vmem:[#allocation4 + $0x70] sm:$0xff]
    %v675 = vld [vmem:[#allocation4 + $0x78] sm:$0xff]
    %v676 = vld [vmem:[#allocation4 + $0x80] sm:$0xff]
    %v677 = vld [vmem:[#allocation4 + $0x88] sm:$0xff]
    %v678 = vld [vmem:[#allocation4 + $0x90] sm:$0xff]
    %v679 = vld [vmem:[#allocation4 + $0x98] sm:$0xff]
    %v680 = vld [vmem:[#allocation4 + $0xa0] sm:$0xff]
    %v681 = vld [vmem:[#allocation4 + $0xa8] sm:$0xff]
    %v682 = vld [vmem:[#allocation4 + $0xb0] sm:$0xff]
    %v683 = vld [vmem:[#allocation4 + $0xb8] sm:$0xff]
    %v684 = vld [vmem:[#allocation4 + $0xc0] sm:$0xff]
    %v685 = vld [vmem:[#allocation4 + $0xc8] sm:$0xff]
    %v686 = vld [vmem:[#allocation4 + $0xd0] sm:$0xff]
    %v687 = vld [vmem:[#allocation4 + $0xd8] sm:$0xff]
    %v688 = vld [vmem:[#allocation4 + $0xe0] sm:$0xff]
    %v689 = vld [vmem:[#allocation4 + $0xe8] sm:$0xff]
    %v690 = vld [vmem:[#allocation4 + $0xf0] sm:$0xff]
    %v691 = vld [vmem:[#allocation4 + $0xf8] sm:$0xff]
    %v724 = vunpack.c.l.b16 %v660
    %v725 = vunpack.c.h.b16 %v660
    %v726 = vunpack.c.l.b16 %v661
    %v727 = vunpack.c.h.b16 %v661
    %v728 = vunpack.c.l.b16 %v662
    %v729 = vunpack.c.h.b16 %v662
    %v730 = vunpack.c.l.b16 %v663
    %v731 = vunpack.c.h.b16 %v663
    %v732 = vunpack.c.l.b16 %v664
    %v733 = vunpack.c.h.b16 %v664
    %v734 = vunpack.c.l.b16 %v665
    %v735 = vunpack.c.h.b16 %v665
    %v736 = vunpack.c.l.b16 %v666
    %v737 = vunpack.c.h.b16 %v666
    %v738 = vunpack.c.l.b16 %v667
    %v739 = vunpack.c.h.b16 %v667
    %v740 = vunpack.c.l.b16 %v668
    %v741 = vunpack.c.h.b16 %v668
    %v742 = vunpack.c.l.b16 %v669
    %v743 = vunpack.c.h.b16 %v669
    %v744 = vunpack.c.l.b16 %v670
    %v745 = vunpack.c.h.b16 %v670
    %v746 = vunpack.c.l.b16 %v671
    %v747 = vunpack.c.h.b16 %v671
    %v748 = vunpack.c.l.b16 %v672
    %v749 = vunpack.c.h.b16 %v672
    %v750 = vunpack.c.l.b16 %v673
    %v751 = vunpack.c.h.b16 %v673
    %v752 = vunpack.c.l.b16 %v674
    %v753 = vunpack.c.h.b16 %v674
    %v754 = vunpack.c.l.b16 %v675
    %v755 = vunpack.c.h.b16 %v675
    %v756 = vunpack.c.l.b16 %v676
    %v757 = vunpack.c.h.b16 %v676
    %v758 = vunpack.c.l.b16 %v677
    %v759 = vunpack.c.h.b16 %v677
    %v760 = vunpack.c.l.b16 %v678
    %v761 = vunpack.c.h.b16 %v678
    %v762 = vunpack.c.l.b16 %v679
    %v763 = vunpack.c.h.b16 %v679
    %v764 = vunpack.c.l.b16 %v680
    %v765 = vunpack.c.h.b16 %v680
    %v766 = vunpack.c.l.b16 %v681
    %v767 = vunpack.c.h.b16 %v681
    %v768 = vunpack.c.l.b16 %v682
    %v769 = vunpack.c.h.b16 %v682
    %v770 = vunpack.c.l.b16 %v683
    %v771 = vunpack.c.h.b16 %v683
    %v772 = vunpack.c.l.b16 %v684
    %v773 = vunpack.c.h.b16 %v684
    %v774 = vunpack.c.l.b16 %v685
    %v775 = vunpack.c.h.b16 %v685
    %v776 = vunpack.c.l.b16 %v686
    %v777 = vunpack.c.h.b16 %v686
    %v778 = vunpack.c.l.b16 %v687
    %v779 = vunpack.c.h.b16 %v687
    %v780 = vunpack.c.l.b16 %v688
    %v781 = vunpack.c.h.b16 %v688
    %v782 = vunpack.c.l.b16 %v689
    %v783 = vunpack.c.h.b16 %v689
    %v784 = vunpack.c.l.b16 %v690
    %v785 = vunpack.c.h.b16 %v690
    %v786 = vunpack.c.l.b16 %v691
    %v787 = vunpack.c.h.b16 %v691
    %v788 = vpack.c.b16 %v726, %v724
    %v789 = vpack.c.b16 %v727, %v725
    %v790 = vpack.c.b16 %v730, %v728
    %v791 = vpack.c.b16 %v731, %v729
    %v792 = vpack.c.b16 %v734, %v732
    %v793 = vpack.c.b16 %v735, %v733
    %v794 = vpack.c.b16 %v738, %v736
    %v795 = vpack.c.b16 %v739, %v737
    %v796 = vpack.c.b16 %v742, %v740
    %v797 = vpack.c.b16 %v743, %v741
    %v798 = vpack.c.b16 %v746, %v744
    %v799 = vpack.c.b16 %v747, %v745
    %v800 = vpack.c.b16 %v750, %v748
    %v801 = vpack.c.b16 %v751, %v749
    %v802 = vpack.c.b16 %v754, %v752
    %v803 = vpack.c.b16 %v755, %v753
    %v804 = vpack.c.b16 %v758, %v756
    %v805 = vpack.c.b16 %v759, %v757
    %v806 = vpack.c.b16 %v762, %v760
    %v807 = vpack.c.b16 %v763, %v761
    %v808 = vpack.c.b16 %v766, %v764
    %v809 = vpack.c.b16 %v767, %v765
    %v810 = vpack.c.b16 %v770, %v768
    %v811 = vpack.c.b16 %v771, %v769
    %v812 = vpack.c.b16 %v774, %v772
    %v813 = vpack.c.b16 %v775, %v773
    %v814 = vpack.c.b16 %v778, %v776
    %v815 = vpack.c.b16 %v779, %v777
    %v816 = vpack.c.b16 %v782, %v780
    %v817 = vpack.c.b16 %v783, %v781
    %v818 = vpack.c.b16 %v786, %v784
    %v819 = vpack.c.b16 %v787, %v785
    %852 = vmatprep.subr.bf16.mxu0 %v789
    %853 = vmatpush1.bf16.msra.mxu0 %v788
    %854 = vmatprep.subr.bf16.mxu0 %v791
    %855 = vmatpush1.bf16.msra.mxu0 %v790
    %856 = vmatprep.subr.bf16.mxu0 %v793
    %857 = vmatpush1.bf16.msra.mxu0 %v792
    %858 = vmatprep.subr.bf16.mxu0 %v795
    %859 = vmatpush1.bf16.msra.mxu0 %v794
    %860 = vmatprep.subr.bf16.mxu0 %v797
    %861 = vmatpush1.bf16.msra.mxu0 %v796
    %862 = vmatprep.subr.bf16.mxu0 %v799
    %863 = vmatpush1.bf16.msra.mxu0 %v798
    %864 = vmatprep.subr.bf16.mxu0 %v801
    %865 = vmatpush1.bf16.msra.mxu0 %v800
    %866 = vmatprep.subr.bf16.mxu0 %v803
    %867 = vmatpush1.bf16.msra.mxu0 %v802
    %868 = vmatprep.subr.bf16.mxu0 %v805
    %869 = vmatpush1.bf16.msra.mxu0 %v804
    %870 = vmatprep.subr.bf16.mxu0 %v807
    %871 = vmatpush1.bf16.msra.mxu0 %v806
    %872 = vmatprep.subr.bf16.mxu0 %v809
    %873 = vmatpush1.bf16.msra.mxu0 %v808
    %874 = vmatprep.subr.bf16.mxu0 %v811
    %875 = vmatpush1.bf16.msra.mxu0 %v810
    %876 = vmatprep.subr.bf16.mxu0 %v813
    %877 = vmatpush1.bf16.msra.mxu0 %v812
    %878 = vmatprep.subr.bf16.mxu0 %v815
    %879 = vmatpush1.bf16.msra.mxu0 %v814
    %880 = vmatprep.subr.bf16.mxu0 %v817
    %881 = vmatpush1.bf16.msra.mxu0 %v816
    %882 = vmatprep.subr.bf16.mxu0 %v819
    %883 = vmatpush1.bf16.msra.mxu0 %v818
    %884 = vmatprep.mubr.bf16.mxu0 %v659
    %885 = vmatmul.mubr.bf16.gmra.mrb[0].mxu0 %v658
    %v886 = vpop.f32.mrb[0].mxu0
    %v887 = vadd.f32 %v526, %v886
    %v888 = vpop.f32.mrb[0].mxu0
    %v889 = vadd.f32 %v528, %v888
    %v890 = vpop.f32.mrb[0].mxu0
    %v891 = vadd.f32 %v530, %v890
    %v892 = vpop.f32.mrb[0].mxu0
    %v893 = vadd.f32 %v532, %v892
    %894 = vdwg.mxu0
    %v895 = vld [vmem:[%s4] sm:$0x3]
    %v897 = vlaneseq
    %v898 = vshrl.u32 %v897, 7
    %v899 = vsub.s32 0, %v898
    %v900 = vrot.slane %v895, %v899
    %v901 = vlaneseq
    %v902 = vshrl.u32 %v901, 7
    %v903 = vsub.s32 1, %v902
    %v904 = vrot.slane %v895, %v903
    %v907 = vadd.f32 %v887, %v900
    %v908 = vadd.f32 %v889, %v904
    %v909 = vadd.f32 %v891, %v900
    %v910 = vadd.f32 %v893, %v904
    %vm911 = vcmp.gt.f32.partialorder %v907, 0.0
    %vm912 = vcmp.gt.f32.partialorder %v908, 0.0
    %vm913 = vcmp.gt.f32.partialorder %v909, 0.0
    %vm914 = vcmp.gt.f32.partialorder %v910, 0.0
    %v915 = vmin.f32 %v907, 0.0
    %v916 = vmin.f32 %v908, 0.0
    %v917 = vmin.f32 %v909, 0.0
    %v918 = vmin.f32 %v910, 0.0
    %v919 = vmul.f32 %v915, 1.442695
    %v920 = vpow.pop %v919
    %v921 = vmul.f32 %v916, 1.442695
    %v922 = vpow.pop %v921
    %v923 = vmul.f32 %v917, 1.442695
    %v924 = vpow.pop %v923
    %v925 = vmul.f32 %v918, 1.442695
    %v926 = vpow.pop %v925
    %v927 = vsub.f32 %v920, 1.0
    %v928 = vsub.f32 %v922, 1.0
    %v929 = vsub.f32 %v924, 1.0
    %v930 = vsub.f32 %v926, 1.0
    %v931 = vsel %vm911, %v907, %v927
    %v932 = vsel %vm912, %v908, %v928
    %v933 = vsel %vm913, %v909, %v929
    %v934 = vsel %vm914, %v910, %v930
    %v935 = vpack.c.bf16 %v933, %v931
    %v936 = vpack.c.bf16 %v934, %v932
    %v937 = vld [vmem:[#allocation6] sm:$0xff]
    %v938 = vld [vmem:[#allocation6 + $0x8] sm:$0xff]
    %v939 = vld [vmem:[#allocation6 + $0x10] sm:$0xff]
    %v940 = vld [vmem:[#allocation6 + $0x18] sm:$0xff]
    %v941 = vld [vmem:[#allocation6 + $0x20] sm:$0xff]
    %v942 = vld [vmem:[#allocation6 + $0x28] sm:$0xff]
    %v943 = vld [vmem:[#allocation6 + $0x30] sm:$0xff]
    %v944 = vld [vmem:[#allocation6 + $0x38] sm:$0xff]
    %v945 = vld [vmem:[#allocation6 + $0x40] sm:$0xff]
    %v946 = vld [vmem:[#allocation6 + $0x48] sm:$0xff]
    %v947 = vld [vmem:[#allocation6 + $0x50] sm:$0xff]
    %v948 = vld [vmem:[#allocation6 + $0x58] sm:$0xff]
    %v949 = vld [vmem:[#allocation6 + $0x60] sm:$0xff]
    %v950 = vld [vmem:[#allocation6 + $0x68] sm:$0xff]
    %v951 = vld [vmem:[#allocation6 + $0x70] sm:$0xff]
    %v952 = vld [vmem:[#allocation6 + $0x78] sm:$0xff]
    %v953 = vld [vmem:[#allocation6 + $0x80] sm:$0xff]
    %v954 = vld [vmem:[#allocation6 + $0x88] sm:$0xff]
    %v955 = vld [vmem:[#allocation6 + $0x90] sm:$0xff]
    %v956 = vld [vmem:[#allocation6 + $0x98] sm:$0xff]
    %v957 = vld [vmem:[#allocation6 + $0xa0] sm:$0xff]
    %v958 = vld [vmem:[#allocation6 + $0xa8] sm:$0xff]
    %v959 = vld [vmem:[#allocation6 + $0xb0] sm:$0xff]
    %v960 = vld [vmem:[#allocation6 + $0xb8] sm:$0xff]
    %v961 = vld [vmem:[#allocation6 + $0xc0] sm:$0xff]
    %v962 = vld [vmem:[#allocation6 + $0xc8] sm:$0xff]
    %v963 = vld [vmem:[#allocation6 + $0xd0] sm:$0xff]
    %v964 = vld [vmem:[#allocation6 + $0xd8] sm:$0xff]
    %v965 = vld [vmem:[#allocation6 + $0xe0] sm:$0xff]
    %v966 = vld [vmem:[#allocation6 + $0xe8] sm:$0xff]
    %v967 = vld [vmem:[#allocation6 + $0xf0] sm:$0xff]
    %v968 = vld [vmem:[#allocation6 + $0xf8] sm:$0xff]
    %v1001 = vunpack.c.l.b16 %v937
    %v1002 = vunpack.c.h.b16 %v937
    %v1003 = vunpack.c.l.b16 %v938
    %v1004 = vunpack.c.h.b16 %v938
    %v1005 = vunpack.c.l.b16 %v939
    %v1006 = vunpack.c.h.b16 %v939
    %v1007 = vunpack.c.l.b16 %v940
    %v1008 = vunpack.c.h.b16 %v940
    %v1009 = vunpack.c.l.b16 %v941
    %v1010 = vunpack.c.h.b16 %v941
    %v1011 = vunpack.c.l.b16 %v942
    %v1012 = vunpack.c.h.b16 %v942
    %v1013 = vunpack.c.l.b16 %v943
    %v1014 = vunpack.c.h.b16 %v943
    %v1015 = vunpack.c.l.b16 %v944
    %v1016 = vunpack.c.h.b16 %v944
    %v1017 = vunpack.c.l.b16 %v945
    %v1018 = vunpack.c.h.b16 %v945
    %v1019 = vunpack.c.l.b16 %v946
    %v1020 = vunpack.c.h.b16 %v946
    %v1021 = vunpack.c.l.b16 %v947
    %v1022 = vunpack.c.h.b16 %v947
    %v1023 = vunpack.c.l.b16 %v948
    %v1024 = vunpack.c.h.b16 %v948
    %v1025 = vunpack.c.l.b16 %v949
    %v1026 = vunpack.c.h.b16 %v949
    %v1027 = vunpack.c.l.b16 %v950
    %v1028 = vunpack.c.h.b16 %v950
    %v1029 = vunpack.c.l.b16 %v951
    %v1030 = vunpack.c.h.b16 %v951
    %v1031 = vunpack.c.l.b16 %v952
    %v1032 = vunpack.c.h.b16 %v952
    %v1033 = vunpack.c.l.b16 %v953
    %v1034 = vunpack.c.h.b16 %v953
    %v1035 = vunpack.c.l.b16 %v954
    %v1036 = vunpack.c.h.b16 %v954
    %v1037 = vunpack.c.l.b16 %v955
    %v1038 = vunpack.c.h.b16 %v955
    %v1039 = vunpack.c.l.b16 %v956
    %v1040 = vunpack.c.h.b16 %v956
    %v1041 = vunpack.c.l.b16 %v957
    %v1042 = vunpack.c.h.b16 %v957
    %v1043 = vunpack.c.l.b16 %v958
    %v1044 = vunpack.c.h.b16 %v958
    %v1045 = vunpack.c.l.b16 %v959
    %v1046 = vunpack.c.h.b16 %v959
    %v1047 = vunpack.c.l.b16 %v960
    %v1048 = vunpack.c.h.b16 %v960
    %v1049 = vunpack.c.l.b16 %v961
    %v1050 = vunpack.c.h.b16 %v961
    %v1051 = vunpack.c.l.b16 %v962
    %v1052 = vunpack.c.h.b16 %v962
    %v1053 = vunpack.c.l.b16 %v963
    %v1054 = vunpack.c.h.b16 %v963
    %v1055 = vunpack.c.l.b16 %v964
    %v1056 = vunpack.c.h.b16 %v964
    %v1057 = vunpack.c.l.b16 %v965
    %v1058 = vunpack.c.h.b16 %v965
    %v1059 = vunpack.c.l.b16 %v966
    %v1060 = vunpack.c.h.b16 %v966
    %v1061 = vunpack.c.l.b16 %v967
    %v1062 = vunpack.c.h.b16 %v967
    %v1063 = vunpack.c.l.b16 %v968
    %v1064 = vunpack.c.h.b16 %v968
    %v1065 = vpack.c.b16 %v1003, %v1001
    %v1066 = vpack.c.b16 %v1004, %v1002
    %v1067 = vpack.c.b16 %v1007, %v1005
    %v1068 = vpack.c.b16 %v1008, %v1006
    %v1069 = vpack.c.b16 %v1011, %v1009
    %v1070 = vpack.c.b16 %v1012, %v1010
    %v1071 = vpack.c.b16 %v1015, %v1013
    %v1072 = vpack.c.b16 %v1016, %v1014
    %v1073 = vpack.c.b16 %v1019, %v1017
    %v1074 = vpack.c.b16 %v1020, %v1018
    %v1075 = vpack.c.b16 %v1023, %v1021
    %v1076 = vpack.c.b16 %v1024, %v1022
    %v1077 = vpack.c.b16 %v1027, %v1025
    %v1078 = vpack.c.b16 %v1028, %v1026
    %v1079 = vpack.c.b16 %v1031, %v1029
    %v1080 = vpack.c.b16 %v1032, %v1030
    %v1081 = vpack.c.b16 %v1035, %v1033
    %v1082 = vpack.c.b16 %v1036, %v1034
    %v1083 = vpack.c.b16 %v1039, %v1037
    %v1084 = vpack.c.b16 %v1040, %v1038
    %v1085 = vpack.c.b16 %v1043, %v1041
    %v1086 = vpack.c.b16 %v1044, %v1042
    %v1087 = vpack.c.b16 %v1047, %v1045
    %v1088 = vpack.c.b16 %v1048, %v1046
    %v1089 = vpack.c.b16 %v1051, %v1049
    %v1090 = vpack.c.b16 %v1052, %v1050
    %v1091 = vpack.c.b16 %v1055, %v1053
    %v1092 = vpack.c.b16 %v1056, %v1054
    %v1093 = vpack.c.b16 %v1059, %v1057
    %v1094 = vpack.c.b16 %v1060, %v1058
    %v1095 = vpack.c.b16 %v1063, %v1061
    %v1096 = vpack.c.b16 %v1064, %v1062
    %1129 = vmatprep.subr.bf16.mxu0 %v1066
    %1130 = vmatpush1.bf16.msra.mxu0 %v1065
    %1131 = vmatprep.subr.bf16.mxu0 %v1068
    %1132 = vmatpush1.bf16.msra.mxu0 %v1067
    %1133 = vmatprep.subr.bf16.mxu0 %v1070
    %1134 = vmatpush1.bf16.msra.mxu0 %v1069
    %1135 = vmatprep.subr.bf16.mxu0 %v1072
    %1136 = vmatpush1.bf16.msra.mxu0 %v1071
    %1137 = vmatprep.subr.bf16.mxu0 %v1074
    %1138 = vmatpush1.bf16.msra.mxu0 %v1073
    %1139 = vmatprep.subr.bf16.mxu0 %v1076
    %1140 = vmatpush1.bf16.msra.mxu0 %v1075
    %1141 = vmatprep.subr.bf16.mxu0 %v1078
    %1142 = vmatpush1.bf16.msra.mxu0 %v1077
    %1143 = vmatprep.subr.bf16.mxu0 %v1080
    %1144 = vmatpush1.bf16.msra.mxu0 %v1079
    %1145 = vmatprep.subr.bf16.mxu0 %v1082
    %1146 = vmatpush1.bf16.msra.mxu0 %v1081
    %1147 = vmatprep.subr.bf16.mxu0 %v1084
    %1148 = vmatpush1.bf16.msra.mxu0 %v1083
    %1149 = vmatprep.subr.bf16.mxu0 %v1086
    %1150 = vmatpush1.bf16.msra.mxu0 %v1085
    %1151 = vmatprep.subr.bf16.mxu0 %v1088
    %1152 = vmatpush1.bf16.msra.mxu0 %v1087
    %1153 = vmatprep.subr.bf16.mxu0 %v1090
    %1154 = vmatpush1.bf16.msra.mxu0 %v1089
    %1155 = vmatprep.subr.bf16.mxu0 %v1092
    %1156 = vmatpush1.bf16.msra.mxu0 %v1091
    %1157 = vmatprep.subr.bf16.mxu0 %v1094
    %1158 = vmatpush1.bf16.msra.mxu0 %v1093
    %1159 = vmatprep.subr.bf16.mxu0 %v1096
    %1160 = vmatpush1.bf16.msra.mxu0 %v1095
    %1161 = vmatprep.mubr.bf16.mxu0 %v936
    %1162 = vmatmul.mubr.bf16.gmra.mrb[0].mxu0 %v935
    %v1163 = vpop.f32.mrb[0].mxu0
    %v1164 = vadd.f32 %v569, %v1163
    %v1165 = vpop.f32.mrb[0].mxu0
    %v1166 = vadd.f32 %v571, %v1165
    %v1167 = vpop.f32.mrb[0].mxu0
    %v1168 = vadd.f32 %v573, %v1167
    %v1169 = vpop.f32.mrb[0].mxu0
    %v1170 = vadd.f32 %v575, %v1169
    %1171 = vdwg.mxu0
    %v1172 = vld [vmem:[%s6] sm:$0x3]
    %v1174 = vlaneseq
    %v1175 = vshrl.u32 %v1174, 7
    %v1176 = vsub.s32 0, %v1175
    %v1177 = vrot.slane %v1172, %v1176
    %v1178 = vlaneseq
    %v1179 = vshrl.u32 %v1178, 7
    %v1180 = vsub.s32 1, %v1179
    %v1181 = vrot.slane %v1172, %v1180
    %v1184 = vadd.f32 %v1164, %v1177
    %v1185 = vadd.f32 %v1166, %v1181
    %v1186 = vadd.f32 %v1168, %v1177
    %v1187 = vadd.f32 %v1170, %v1181
    %vm1188 = vcmp.gt.f32.partialorder %v1184, 0.0
    %vm1189 = vcmp.gt.f32.partialorder %v1185, 0.0
    %vm1190 = vcmp.gt.f32.partialorder %v1186, 0.0
    %vm1191 = vcmp.gt.f32.partialorder %v1187, 0.0
    %v1192 = vmin.f32 %v1184, 0.0
    %v1193 = vmin.f32 %v1185, 0.0
    %v1194 = vmin.f32 %v1186, 0.0
    %v1195 = vmin.f32 %v1187, 0.0
    %v1196 = vmul.f32 %v1192, 1.442695
    %v1197 = vpow.pop %v1196
    %v1198 = vmul.f32 %v1193, 1.442695
    %v1199 = vpow.pop %v1198
    %v1200 = vmul.f32 %v1194, 1.442695
    %v1201 = vpow.pop %v1200
    %v1202 = vmul.f32 %v1195, 1.442695
    %v1203 = vpow.pop %v1202
    %v1204 = vsub.f32 %v1197, 1.0
    %v1205 = vsub.f32 %v1199, 1.0
    %v1206 = vsub.f32 %v1201, 1.0
    %v1207 = vsub.f32 %v1203, 1.0
    %v1208 = vsel %vm1188, %v1184, %v1204
    %v1209 = vsel %vm1189, %v1185, %v1205
    %v1210 = vsel %vm1190, %v1186, %v1206
    %v1211 = vsel %vm1191, %v1187, %v1207
    %v1212 = vpack.c.bf16 %v1210, %v1208
    %v1213 = vpack.c.bf16 %v1211, %v1209
    %v1214 = vld [vmem:[#allocation7] sm:$0xf]
    %v1215 = vld [vmem:[#allocation7 + $0x4] sm:$0xf]
    %v1216 = vld [vmem:[#allocation7 + $0x8] sm:$0xf]
    %v1217 = vld [vmem:[#allocation7 + $0xc] sm:$0xf]
    %v1218 = vld [vmem:[#allocation7 + $0x10] sm:$0xf]
    %v1219 = vld [vmem:[#allocation7 + $0x14] sm:$0xf]
    %v1220 = vld [vmem:[#allocation7 + $0x18] sm:$0xf]
    %v1221 = vld [vmem:[#allocation7 + $0x1c] sm:$0xf]
    %v1222 = vld [vmem:[#allocation7 + $0x20] sm:$0xf]
    %v1223 = vld [vmem:[#allocation7 + $0x24] sm:$0xf]
    %v1224 = vld [vmem:[#allocation7 + $0x28] sm:$0xf]
    %v1225 = vld [vmem:[#allocation7 + $0x2c] sm:$0xf]
    %v1226 = vld [vmem:[#allocation7 + $0x30] sm:$0xf]
    %v1227 = vld [vmem:[#allocation7 + $0x34] sm:$0xf]
    %v1228 = vld [vmem:[#allocation7 + $0x38] sm:$0xf]
    %v1229 = vld [vmem:[#allocation7 + $0x3c] sm:$0xf]
    %v1230 = vld [vmem:[#allocation7 + $0x40] sm:$0xf]
    %v1231 = vld [vmem:[#allocation7 + $0x44] sm:$0xf]
    %v1232 = vld [vmem:[#allocation7 + $0x48] sm:$0xf]
    %v1233 = vld [vmem:[#allocation7 + $0x4c] sm:$0xf]
    %v1234 = vld [vmem:[#allocation7 + $0x50] sm:$0xf]
    %v1235 = vld [vmem:[#allocation7 + $0x54] sm:$0xf]
    %v1236 = vld [vmem:[#allocation7 + $0x58] sm:$0xf]
    %v1237 = vld [vmem:[#allocation7 + $0x5c] sm:$0xf]
    %v1238 = vld [vmem:[#allocation7 + $0x60] sm:$0xf]
    %v1239 = vld [vmem:[#allocation7 + $0x64] sm:$0xf]
    %v1240 = vld [vmem:[#allocation7 + $0x68] sm:$0xf]
    %v1241 = vld [vmem:[#allocation7 + $0x6c] sm:$0xf]
    %v1242 = vld [vmem:[#allocation7 + $0x70] sm:$0xf]
    %v1243 = vld [vmem:[#allocation7 + $0x74] sm:$0xf]
    %v1244 = vld [vmem:[#allocation7 + $0x78] sm:$0xf]
    %v1245 = vld [vmem:[#allocation7 + $0x7c] sm:$0xf]
    %v1278 = vunpack.c.l.b16 %v1214
    %v1279 = vunpack.c.l.b16 %v1215
    %v1280 = vunpack.c.l.b16 %v1216
    %v1281 = vunpack.c.l.b16 %v1217
    %v1282 = vunpack.c.l.b16 %v1218
    %v1283 = vunpack.c.l.b16 %v1219
    %v1284 = vunpack.c.l.b16 %v1220
    %v1285 = vunpack.c.l.b16 %v1221
    %v1286 = vunpack.c.l.b16 %v1222
    %v1287 = vunpack.c.l.b16 %v1223
    %v1288 = vunpack.c.l.b16 %v1224
    %v1289 = vunpack.c.l.b16 %v1225
    %v1290 = vunpack.c.l.b16 %v1226
    %v1291 = vunpack.c.l.b16 %v1227
    %v1292 = vunpack.c.l.b16 %v1228
    %v1293 = vunpack.c.l.b16 %v1229
    %v1294 = vunpack.c.l.b16 %v1230
    %v1295 = vunpack.c.l.b16 %v1231
    %v1296 = vunpack.c.l.b16 %v1232
    %v1297 = vunpack.c.l.b16 %v1233
    %v1298 = vunpack.c.l.b16 %v1234
    %v1299 = vunpack.c.l.b16 %v1235
    %v1300 = vunpack.c.l.b16 %v1236
    %v1301 = vunpack.c.l.b16 %v1237
    %v1302 = vunpack.c.l.b16 %v1238
    %v1303 = vunpack.c.l.b16 %v1239
    %v1304 = vunpack.c.l.b16 %v1240
    %v1305 = vunpack.c.l.b16 %v1241
    %v1306 = vunpack.c.l.b16 %v1242
    %v1307 = vunpack.c.l.b16 %v1243
    %v1308 = vunpack.c.l.b16 %v1244
    %v1309 = vunpack.c.l.b16 %v1245
    %v1310 = vpack.c.b16 %v1279, %v1278
    %v1311 = vpack.c.b16 %v1281, %v1280
    %v1312 = vpack.c.b16 %v1283, %v1282
    %v1313 = vpack.c.b16 %v1285, %v1284
    %v1314 = vpack.c.b16 %v1287, %v1286
    %v1315 = vpack.c.b16 %v1289, %v1288
    %v1316 = vpack.c.b16 %v1291, %v1290
    %v1317 = vpack.c.b16 %v1293, %v1292
    %v1318 = vpack.c.b16 %v1295, %v1294
    %v1319 = vpack.c.b16 %v1297, %v1296
    %v1320 = vpack.c.b16 %v1299, %v1298
    %v1321 = vpack.c.b16 %v1301, %v1300
    %v1322 = vpack.c.b16 %v1303, %v1302
    %v1323 = vpack.c.b16 %v1305, %v1304
    %v1324 = vpack.c.b16 %v1307, %v1306
    %v1325 = vpack.c.b16 %v1309, %v1308
    %1342 = vmatprep.subr.bf16.mxu0 0
    %1343 = vmatpush1.bf16.msra.mxu0 %v1310
    %1344 = vmatprep.subr.bf16.mxu0 0
    %1345 = vmatpush1.bf16.msra.mxu0 %v1311
    %1346 = vmatprep.subr.bf16.mxu0 0
    %1347 = vmatpush1.bf16.msra.mxu0 %v1312
    %1348 = vmatprep.subr.bf16.mxu0 0
    %1349 = vmatpush1.bf16.msra.mxu0 %v1313
    %1350 = vmatprep.subr.bf16.mxu0 0
    %1351 = vmatpush1.bf16.msra.mxu0 %v1314
    %1352 = vmatprep.subr.bf16.mxu0 0
    %1353 = vmatpush1.bf16.msra.mxu0 %v1315
    %1354 = vmatprep.subr.bf16.mxu0 0
    %1355 = vmatpush1.bf16.msra.mxu0 %v1316
    %1356 = vmatprep.subr.bf16.mxu0 0
    %1357 = vmatpush1.bf16.msra.mxu0 %v1317
    %1358 = vmatprep.subr.bf16.mxu0 0
    %1359 = vmatpush1.bf16.msra.mxu0 %v1318
    %1360 = vmatprep.subr.bf16.mxu0 0
    %1361 = vmatpush1.bf16.msra.mxu0 %v1319
    %1362 = vmatprep.subr.bf16.mxu0 0
    %1363 = vmatpush1.bf16.msra.mxu0 %v1320
    %1364 = vmatprep.subr.bf16.mxu0 0
    %1365 = vmatpush1.bf16.msra.mxu0 %v1321
    %1366 = vmatprep.subr.bf16.mxu0 0
    %1367 = vmatpush1.bf16.msra.mxu0 %v1322
    %1368 = vmatprep.subr.bf16.mxu0 0
    %1369 = vmatpush1.bf16.msra.mxu0 %v1323
    %1370 = vmatprep.subr.bf16.mxu0 0
    %1371 = vmatpush1.bf16.msra.mxu0 %v1324
    %1372 = vmatprep.subr.bf16.mxu0 0
    %1373 = vmatpush1.bf16.msra.mxu0 %v1325
    %1374 = vmatprep.mubr.bf16.mxu0 %v1213
    %1375 = vmatmul.mubr.bf16.gmra.mrb[0].mxu0 %v1212
    %v1376 = vpop.f32.mrb[0].mxu0
    %v1377 = vadd.f32 %v612, %v1376
    %v1378 = vpop.f32.mrb[0].mxu0
    %v1379 = vpop.f32.mrb[0].mxu0
    %v1380 = vadd.f32 %v615, %v1379
    %v1381 = vpop.f32.mrb[0].mxu0
    %1382 = vdwg.mxu0
    %v1383 = vld [vmem:[%s8] sm:$0x1]
    %v1385 = vlaneseq
    %v1386 = vshrl.u32 %v1385, 7
    %v1387 = vsub.s32 0, %v1386
    %v1388 = vrot.slane %v1383, %v1387
    %v1390 = vadd.f32 %v1377, %v1388
    %v1391 = vadd.f32 %v1380, %v1388
    %1392 = vst [vmem:[%s9] sm:$0xff] %v1390
    %1393 = vst [vmem:[%s9 + $0x8] sm:$0xff] %v1391
    // Predicated region
    $region54: #{expert_forward.1} parent=1 // pred_check
      _
    $region55: #{expert_forward.1} parent=1 // pred_check_branch
      %1395 = sbr.rel (0) target = $region57
    $region56: #{expert_forward.1} parent=1 // pred_region
      _
    $region57: #{expert_forward.1} parent=1 // pred_fallthru
      _
    // Predicated region
    $region58: #{expert_forward.1} parent=1 // pred_check
      _
    $region59: #{expert_forward.1} parent=1 // pred_check_branch
      %1397 = sbr.rel (0) target = $region61
    $region60: #{expert_forward.1} parent=1 // pred_region
      _
    $region61: #{expert_forward.1} parent=1 // pred_fallthru
      _
    %1398 = vsyncpa [#allocation3], 1
    %1399 = vsyncpa [#allocation5], 1
    %1400 = vsyncpa [#allocation8], 1

</llo_original>
